<compile_context>
chip_gen: v7x
topology: tpu7x:2x2x1
jax: 0.10.0
libtpu: 0.0.40
codegen_flags: <defaults>
</compile_context>

<pallas_src>
import functools

import numpy as np
import jax
import jax.numpy as jnp
from jax import lax
from jax.experimental import pallas as pl
from jax.experimental.pallas import tpu as pltpu


def creat_real_dictionary(T, rr, theta):
    """Plain-JAX glue: (T, 1+2N) pole dictionary from the learnable params."""
    i = jnp.arange(T, dtype=jnp.float32)[:, None]            # (T, 1)
    pow_i = jnp.power(rr[None, :], i)                        # (T, N)
    w1 = pow_i * jnp.cos(i * theta[None, :])                 # (T, N)
    w2 = pow_i * jnp.sin(i * theta[None, :])                 # (T, N)
    ones = jnp.ones((T, 1), jnp.float32)
    return jnp.concatenate([ones, w1, w2], axis=1)           # (T, 1 + 2N)


def _softshrink(v, lam):
    # softshrink(v, lam) = v - clamp(v, -lam, lam): min, max, sub (3 VPU ops).
    return v - jnp.minimum(jnp.maximum(v, -lam), lam)


def _fista_kernel(lam_ref, tt_ref, a_ref, b_ref, code_ref, *,
                  max_iter, thresh0_sq, thresh1_sq, unroll):
    """FISTA on one column tile: A (Kp,Kp), b = DtY/L (Kp,TN) -> code (Kp,TN).

    State (x, y, done) lives in loop carries (vregs); code_ref is written once
    at the end.  Convergence (squared norm vs squared threshold, no sqrt) is
    checked once per unroll block on the last step's diff and implements a
    real break via lax.while_loop.
    """
    A = a_ref[...]                                           # (Kp, Kp)
    b = b_ref[...]                                           # (Kp, TN)
    lam = lam_ref[0]                                         # scalar f32 (SMEM)

    # ---- peeled iteration 0: x_old = y_old = 0  =>  A@y + b = b -----------
    x0 = _softshrink(b, lam)
    # tt_0 = (t_0 - 1) / t_1 = 0, so the momentum iterate equals x0.
    sq0 = jnp.sum(x0 * x0)                                   # ||0 - x0||^2
    done0 = (sq0 < thresh0_sq).astype(jnp.int32)             # torch divides by M here

    def fista_step(ii, x, y):
        # TODO(synk): optionally cast A / y to bf16 for the MXU on v6e/v7x
        # (keep f32 accumulation); validate against the 1e-4 tolerance first.
        v = jnp.dot(A, y, preferred_element_type=jnp.float32) + b
        x_new = _softshrink(v, lam)
        d = x_new - x                                        # reused: momentum + check
        y_new = x_new + tt_ref[ii] * d                       # x*(1+tt) - x_old*tt
        return x_new, y_new, d

    n_main = (max_iter - 1) // unroll
    rem = (max_iter - 1) % unroll

    # ---- main loop: `unroll` steps per block, one convergence check/block --
    def main_cond(c):
        k, done, _, _ = c
        return jnp.logical_and(done == 0, k < n_main)

    def main_body(c):
        k, _, x, y = c
        d = x
        for u in range(unroll):                              # manual unroll (LLO visibility)
            x, y, d = fista_step(k * unroll + 1 + u, x, y)
        sq = jnp.sum(d * d)                                  # last step's diff only
        return k + 1, (sq < thresh1_sq).astype(jnp.int32), x, y

    _, done, x, y = lax.while_loop(main_cond, main_body,
                                   (jnp.int32(0), done0, x0, x0))

    # ---- exact remainder (max_iter - 1) % unroll, checked per step ---------
    if rem:
        def tail_cond(c):
            r, done, _, _ = c
            return jnp.logical_and(done == 0, r < rem)

        def tail_body(c):
            r, _, x, y = c
            x, y, d = fista_step(n_main * unroll + 1 + r, x, y)
            sq = jnp.sum(d * d)
            return r + 1, (sq < thresh1_sq).astype(jnp.int32), x, y

        _, _, x, _ = lax.while_loop(tail_cond, tail_body,
                                    (jnp.int32(0), done, x, y))

    code_ref[...] = x                                        # single lane-dense store


@functools.partial(jax.jit, static_argnames=("T", "lambd", "max_iter"))
def encoder_forward(rr, theta, x, T, lambd=0.1, max_iter=100):
    """Equivalent of Encoder.forward(x, T): returns (sparsecode, dic)."""
    B, T_in, M = x.shape
    assert T_in == T
    dic = creat_real_dictionary(T, rr, theta)                # (T, K)
    K = dic.shape[1]

    # --- one-time FISTA setup in plain XLA (fuses with dictionary build) ---
    DtD = jnp.dot(dic.T, dic, preferred_element_type=jnp.float32)   # (K, K)
    # torch.norm(DtD, 2) with dim=None flattens -> Frobenius norm (faithful).
    L = jnp.sqrt(jnp.sum(DtD * DtD))
    linv = 1.0 / L
    A = jnp.eye(K, dtype=jnp.float32) - DtD * linv                   # (K, K)
    lam = jnp.reshape(jnp.float32(lambd) * linv, (1,))               # scalar -> SMEM

    BM = B * M
    BMp = ((BM + 127) // 128) * 128          # lane-dense column axis
    Kp = ((K + 7) // 8) * 8                  # sublane-aligned row axis
    # Column tile: multiple of 128; 256 keeps A,b,x,y,v,d comfortably inside
    # the 64-vreg file per tile (sweep 256-1024 for huge B*M if DMA-exposed).
    TN = min(256, BMp)
    grid = (BMp // TN,)

    y2d = jnp.transpose(x, (1, 0, 2)).reshape(T, BM)                 # (T, B*M)
    b = jnp.dot(dic.T, y2d, preferred_element_type=jnp.float32) * linv   # (K, BM)
    b = jnp.pad(b, ((0, Kp - K), (0, BMp - BM)))                     # zero pad
    A = jnp.pad(A, ((0, Kp - K), (0, Kp - K)))                       # zero pad

    # Momentum schedule tt_k = (t_k - 1) / t_{k+1} is data-independent:
    # precompute it (trace time) and pass via SMEM -> no sqrt in the loop.
    t = 1.0
    tts = []
    for _ in range(max_iter):
        t_new = (1.0 + float(np.sqrt(1.0 + 4.0 * t * t))) / 2.0
        tts.append((t - 1.0) / t_new)
        t = t_new
    tt = jnp.asarray(np.asarray(tts, dtype=np.float32))              # (max_iter,)

    # Torch convergence: ||x_old - x_new||_2 / divisor < 1e-4, divisor = M on
    # iteration 0 (x_old is the (K,M) zero init) and K afterwards; sqrt removed
    # by comparing squared norm against squared threshold.
    thresh0_sq = float((1e-4 * M) ** 2)
    thresh1_sq = float((1e-4 * K) ** 2)

    kernel = functools.partial(_fista_kernel, max_iter=max_iter,
                               thresh0_sq=thresh0_sq, thresh1_sq=thresh1_sq,
                               unroll=4)
    code2d = pl.pallas_call(
        kernel,
        out_shape=jax.ShapeDtypeStruct((Kp, BMp), jnp.float32),
        grid=grid,
        in_specs=[
            pl.BlockSpec(memory_space=pltpu.MemorySpace.SMEM),   # lam
            pl.BlockSpec(memory_space=pltpu.MemorySpace.SMEM),   # tt schedule
            pl.BlockSpec((Kp, Kp), lambda j: (0, 0)),            # A (replicated per tile)
            pl.BlockSpec((Kp, TN), lambda j: (0, j)),            # b = DtY/L column tile
        ],
        out_specs=pl.BlockSpec((Kp, TN), lambda j: (0, j)),
        compiler_params=pltpu.CompilerParams(
            dimension_semantics=("parallel",)),
    )(lam, tt, A, b)

    sparse_code = jnp.transpose(code2d[:K, :BM].reshape(K, B, M), (1, 0, 2))
    return sparse_code, dic


if __name__ == "__main__":
    key = jax.random.PRNGKey(0)
    k1, k2, k3 = jax.random.split(key, 3)

    N = 8            # number of poles -> dictionary width K = 1 + 2N = 17
    T = 16           # sequence length
    B, M = 2, 24     # batch, feature dim

    # Deterministic DYAN-style parameter init: rr near 1, theta in (0, pi).
    rr = jax.random.uniform(k1, (N,), jnp.float32, minval=0.8, maxval=1.1)
    theta = jax.random.uniform(k2, (N,), jnp.float32, minval=0.1, maxval=3.0)
    x = jax.random.normal(k3, (B, T, M), jnp.float32)

    code, dic = encoder_forward(rr, theta, x, T=T)
    jax.block_until_ready((code, dic))

    assert code.shape == (B, 1 + 2 * N, M)
    assert dic.shape == (T, 1 + 2 * N)
    assert bool(jnp.all(jnp.isfinite(code))) and bool(jnp.all(jnp.isfinite(dic)))
    print("KERNEL_OK")
</pallas_src>

<mosaic_0001>
module attributes {stable_mosaic.version = 11 : i64} {
  func.func @_fista_kernel(%arg0: i32, %arg1: memref<1xf32, #tpu.memory_space<smem>>, %arg2: memref<100xf32, #tpu.memory_space<smem>>, %arg3: memref<24x24xf32, #tpu.memory_space<vmem>>, %arg4: memref<24x128xf32, #tpu.memory_space<vmem>>, %arg5: memref<24x128xf32, #tpu.memory_space<vmem>>) attributes {dimension_semantics = [#tpu.dimension_semantics<parallel>], iteration_bounds = array<i64: 1>, scalar_prefetch = 0 : i64, scratch_operands = 0 : i64, tpu.core_type = #tpu.core_type<tc>, window_params = [{transform_indices = @transform_0, window_bounds = array<i64: 1>}, {transform_indices = @transform_1, window_bounds = array<i64: 100>}, {pipeline_mode = #tpu.pipeline_mode<synchronous>, transform_indices = @transform_2, window_bounds = array<i64: 24, 24>}, {transform_indices = @transform_3, window_bounds = array<i64: 24, 128>}, {transform_indices = @transform_4, window_bounds = array<i64: 24, 128>}]} {
    %c0 = arith.constant 0 : index
    %c0_0 = arith.constant 0 : index
    %0 = vector.load %arg3[%c0, %c0_0] : memref<24x24xf32, #tpu.memory_space<vmem>>, vector<24x24xf32>
    %c0_1 = arith.constant 0 : index
    %c0_2 = arith.constant 0 : index
    %1 = vector.load %arg4[%c0_1, %c0_2] : memref<24x128xf32, #tpu.memory_space<vmem>>, vector<24x128xf32>
    %c0_3 = arith.constant 0 : index
    %2 = memref.load %arg1[%c0_3] : memref<1xf32, #tpu.memory_space<smem>>
    %cst = arith.constant 0.000000e+00 : f32
    %3 = arith.subf %cst, %2 : f32
    %4 = vector.broadcast %3 : f32 to vector<24x128xf32>
    %5 = arith.maximumf %1, %4 : vector<24x128xf32>
    %6 = vector.broadcast %2 : f32 to vector<24x128xf32>
    %7 = arith.minimumf %5, %6 : vector<24x128xf32>
    %8 = arith.subf %1, %7 : vector<24x128xf32>
    %9 = arith.mulf %8, %8 : vector<24x128xf32>
    %10 = vector.shape_cast %9 : vector<24x128xf32> to vector<1x24x128xf32>
    %cst_4 = arith.constant dense<0.000000e+00> : vector<1xf32>
    %11 = vector.multi_reduction <add>, %10, %cst_4 [1, 2] : vector<1x24x128xf32> to vector<1xf32>
    %12 = vector.shape_cast %11 : vector<1xf32> to vector<1x1x1xf32>
    %13 = vector.extract %12[0, 0, 0] : f32 from vector<1x1x1xf32>
    %cst_5 = arith.constant 5.760000e-06 : f32
    %14 = arith.cmpf olt, %13, %cst_5 : f32
    %15 = arith.extui %14 : i1 to i32
    %c0_i32 = arith.constant 0 : i32
    %16:4 = scf.while (%arg6 = %c0_i32, %arg7 = %15, %arg8 = %8, %arg9 = %8) : (i32, i32, vector<24x128xf32>, vector<24x128xf32>) -> (i32, i32, vector<24x128xf32>, vector<24x128xf32>) {
      %c0_i32_9 = arith.constant 0 : i32
      %19 = arith.cmpi eq, %arg7, %c0_i32_9 : i32
      %c24_i32 = arith.constant 24 : i32
      %20 = arith.cmpi slt, %arg6, %c24_i32 : i32
      %21 = arith.andi %19, %20 : i1
      scf.condition(%21) %arg6, %arg7, %arg8, %arg9 : i32, i32, vector<24x128xf32>, vector<24x128xf32>
    } do {
    ^bb0(%arg6: i32, %arg7: i32, %arg8: vector<24x128xf32>, %arg9: vector<24x128xf32>):
      %c4_i32 = arith.constant 4 : i32
      %19 = arith.muli %arg6, %c4_i32 : i32
      %c1_i32 = arith.constant 1 : i32
      %20 = arith.addi %19, %c1_i32 : i32
      %c0_i32_9 = arith.constant 0 : i32
      %21 = arith.addi %20, %c0_i32_9 : i32
      %cst_10 = arith.constant dense<0.000000e+00> : vector<24x128xf32>
      %22 = tpu.matmul %0, %arg9, %cst_10 {dimension_numbers = #tpu.dot_dimension_numbers<[1], [0], [0], [1], [0, 0, 1, 1], [], []>} : vector<24x24xf32>, vector<24x128xf32>, vector<24x128xf32> -> vector<24x128xf32>
      %23 = arith.addf %22, %1 : vector<24x128xf32>
      %cst_11 = arith.constant 0.000000e+00 : f32
      %24 = arith.subf %cst_11, %2 : f32
      %25 = vector.broadcast %24 : f32 to vector<24x128xf32>
      %26 = arith.maximumf %23, %25 : vector<24x128xf32>
      %27 = vector.broadcast %2 : f32 to vector<24x128xf32>
      %28 = arith.minimumf %26, %27 : vector<24x128xf32>
      %29 = arith.subf %23, %28 : vector<24x128xf32>
      %30 = arith.subf %29, %arg8 : vector<24x128xf32>
      %31 = arith.index_cast %21 : i32 to index
      %32 = memref.load %arg2[%31] : memref<100xf32, #tpu.memory_space<smem>>
      %33 = vector.broadcast %32 : f32 to vector<24x128xf32>
      %34 = arith.mulf %33, %30 : vector<24x128xf32>
      %35 = arith.addf %29, %34 : vector<24x128xf32>
      %c4_i32_12 = arith.constant 4 : i32
      %36 = arith.muli %arg6, %c4_i32_12 : i32
      %c1_i32_13 = arith.constant 1 : i32
      %37 = arith.addi %36, %c1_i32_13 : i32
      %c1_i32_14 = arith.constant 1 : i32
      %38 = arith.addi %37, %c1_i32_14 : i32
      %cst_15 = arith.constant dense<0.000000e+00> : vector<24x128xf32>
      %39 = tpu.matmul %0, %35, %cst_15 {dimension_numbers = #tpu.dot_dimension_numbers<[1], [0], [0], [1], [0, 0, 1, 1], [], []>} : vector<24x24xf32>, vector<24x128xf32>, vector<24x128xf32> -> vector<24x128xf32>
      %40 = arith.addf %39, %1 : vector<24x128xf32>
      %cst_16 = arith.constant 0.000000e+00 : f32
      %41 = arith.subf %cst_16, %2 : f32
      %42 = vector.broadcast %41 : f32 to vector<24x128xf32>
      %43 = arith.maximumf %40, %42 : vector<24x128xf32>
      %44 = vector.broadcast %2 : f32 to vector<24x128xf32>
      %45 = arith.minimumf %43, %44 : vector<24x128xf32>
      %46 = arith.subf %40, %45 : vector<24x128xf32>
      %47 = arith.subf %46, %29 : vector<24x128xf32>
      %48 = arith.index_cast %38 : i32 to index
      %49 = memref.load %arg2[%48] : memref<100xf32, #tpu.memory_space<smem>>
      %50 = vector.broadcast %49 : f32 to vector<24x128xf32>
      %51 = arith.mulf %50, %47 : vector<24x128xf32>
      %52 = arith.addf %46, %51 : vector<24x128xf32>
      %c4_i32_17 = arith.constant 4 : i32
      %53 = arith.muli %arg6, %c4_i32_17 : i32
      %c1_i32_18 = arith.constant 1 : i32
      %54 = arith.addi %53, %c1_i32_18 : i32
      %c2_i32 = arith.constant 2 : i32
      %55 = arith.addi %54, %c2_i32 : i32
      %cst_19 = arith.constant dense<0.000000e+00> : vector<24x128xf32>
      %56 = tpu.matmul %0, %52, %cst_19 {dimension_numbers = #tpu.dot_dimension_numbers<[1], [0], [0], [1], [0, 0, 1, 1], [], []>} : vector<24x24xf32>, vector<24x128xf32>, vector<24x128xf32> -> vector<24x128xf32>
      %57 = arith.addf %56, %1 : vector<24x128xf32>
      %cst_20 = arith.constant 0.000000e+00 : f32
      %58 = arith.subf %cst_20, %2 : f32
      %59 = vector.broadcast %58 : f32 to vector<24x128xf32>
      %60 = arith.maximumf %57, %59 : vector<24x128xf32>
      %61 = vector.broadcast %2 : f32 to vector<24x128xf32>
      %62 = arith.minimumf %60, %61 : vector<24x128xf32>
      %63 = arith.subf %57, %62 : vector<24x128xf32>
      %64 = arith.subf %63, %46 : vector<24x128xf32>
      %65 = arith.index_cast %55 : i32 to index
      %66 = memref.load %arg2[%65] : memref<100xf32, #tpu.memory_space<smem>>
      %67 = vector.broadcast %66 : f32 to vector<24x128xf32>
      %68 = arith.mulf %67, %64 : vector<24x128xf32>
      %69 = arith.addf %63, %68 : vector<24x128xf32>
      %c4_i32_21 = arith.constant 4 : i32
      %70 = arith.muli %arg6, %c4_i32_21 : i32
      %c1_i32_22 = arith.constant 1 : i32
      %71 = arith.addi %70, %c1_i32_22 : i32
      %c3_i32 = arith.constant 3 : i32
      %72 = arith.addi %71, %c3_i32 : i32
      %cst_23 = arith.constant dense<0.000000e+00> : vector<24x128xf32>
      %73 = tpu.matmul %0, %69, %cst_23 {dimension_numbers = #tpu.dot_dimension_numbers<[1], [0], [0], [1], [0, 0, 1, 1], [], []>} : vector<24x24xf32>, vector<24x128xf32>, vector<24x128xf32> -> vector<24x128xf32>
      %74 = arith.addf %73, %1 : vector<24x128xf32>
      %cst_24 = arith.constant 0.000000e+00 : f32
      %75 = arith.subf %cst_24, %2 : f32
      %76 = vector.broadcast %75 : f32 to vector<24x128xf32>
      %77 = arith.maximumf %74, %76 : vector<24x128xf32>
      %78 = vector.broadcast %2 : f32 to vector<24x128xf32>
      %79 = arith.minimumf %77, %78 : vector<24x128xf32>
      %80 = arith.subf %74, %79 : vector<24x128xf32>
      %81 = arith.subf %80, %63 : vector<24x128xf32>
      %82 = arith.index_cast %72 : i32 to index
      %83 = memref.load %arg2[%82] : memref<100xf32, #tpu.memory_space<smem>>
      %84 = vector.broadcast %83 : f32 to vector<24x128xf32>
      %85 = arith.mulf %84, %81 : vector<24x128xf32>
      %86 = arith.addf %80, %85 : vector<24x128xf32>
      %87 = arith.mulf %81, %81 : vector<24x128xf32>
      %88 = vector.shape_cast %87 : vector<24x128xf32> to vector<1x24x128xf32>
      %cst_25 = arith.constant dense<0.000000e+00> : vector<1xf32>
      %89 = vector.multi_reduction <add>, %88, %cst_25 [1, 2] : vector<1x24x128xf32> to vector<1xf32>
      %90 = vector.shape_cast %89 : vector<1xf32> to vector<1x1x1xf32>
      %91 = vector.extract %90[0, 0, 0] : f32 from vector<1x1x1xf32>
      %c1_i32_26 = arith.constant 1 : i32
      %92 = arith.addi %arg6, %c1_i32_26 : i32
      %cst_27 = arith.constant 2.890000e-06 : f32
      %93 = arith.cmpf olt, %91, %cst_27 : f32
      %94 = arith.extui %93 : i1 to i32
      scf.yield %92, %94, %80, %86 : i32, i32, vector<24x128xf32>, vector<24x128xf32>
    }
    %c0_i32_6 = arith.constant 0 : i32
    %17:4 = scf.while (%arg6 = %c0_i32_6, %arg7 = %16#1, %arg8 = %16#2, %arg9 = %16#3) : (i32, i32, vector<24x128xf32>, vector<24x128xf32>) -> (i32, i32, vector<24x128xf32>, vector<24x128xf32>) {
      %c0_i32_9 = arith.constant 0 : i32
      %19 = arith.cmpi eq, %arg7, %c0_i32_9 : i32
      %c3_i32 = arith.constant 3 : i32
      %20 = arith.cmpi slt, %arg6, %c3_i32 : i32
      %21 = arith.andi %19, %20 : i1
      scf.condition(%21) %arg6, %arg7, %arg8, %arg9 : i32, i32, vector<24x128xf32>, vector<24x128xf32>
    } do {
    ^bb0(%arg6: i32, %arg7: i32, %arg8: vector<24x128xf32>, %arg9: vector<24x128xf32>):
      %c97_i32 = arith.constant 97 : i32
      %19 = arith.addi %c97_i32, %arg6 : i32
      %cst_9 = arith.constant dense<0.000000e+00> : vector<24x128xf32>
      %20 = tpu.matmul %0, %arg9, %cst_9 {dimension_numbers = #tpu.dot_dimension_numbers<[1], [0], [0], [1], [0, 0, 1, 1], [], []>} : vector<24x24xf32>, vector<24x128xf32>, vector<24x128xf32> -> vector<24x128xf32>
      %21 = arith.addf %20, %1 : vector<24x128xf32>
      %cst_10 = arith.constant 0.000000e+00 : f32
      %22 = arith.subf %cst_10, %2 : f32
      %23 = vector.broadcast %22 : f32 to vector<24x128xf32>
      %24 = arith.maximumf %21, %23 : vector<24x128xf32>
      %25 = vector.broadcast %2 : f32 to vector<24x128xf32>
      %26 = arith.minimumf %24, %25 : vector<24x128xf32>
      %27 = arith.subf %21, %26 : vector<24x128xf32>
      %28 = arith.subf %27, %arg8 : vector<24x128xf32>
      %29 = arith.index_cast %19 : i32 to index
      %30 = memref.load %arg2[%29] : memref<100xf32, #tpu.memory_space<smem>>
      %31 = vector.broadcast %30 : f32 to vector<24x128xf32>
      %32 = arith.mulf %31, %28 : vector<24x128xf32>
      %33 = arith.addf %27, %32 : vector<24x128xf32>
      %34 = arith.mulf %28, %28 : vector<24x128xf32>
      %35 = vector.shape_cast %34 : vector<24x128xf32> to vector<1x24x128xf32>
      %cst_11 = arith.constant dense<0.000000e+00> : vector<1xf32>
      %36 = vector.multi_reduction <add>, %35, %cst_11 [1, 2] : vector<1x24x128xf32> to vector<1xf32>
      %37 = vector.shape_cast %36 : vector<1xf32> to vector<1x1x1xf32>
      %38 = vector.extract %37[0, 0, 0] : f32 from vector<1x1x1xf32>
      %c1_i32 = arith.constant 1 : i32
      %39 = arith.addi %arg6, %c1_i32 : i32
      %cst_12 = arith.constant 2.890000e-06 : f32
      %40 = arith.cmpf olt, %38, %cst_12 : f32
      %41 = arith.extui %40 : i1 to i32
      scf.yield %39, %41, %27, %33 : i32, i32, vector<24x128xf32>, vector<24x128xf32>
    }
    %c0_7 = arith.constant 0 : index
    %c0_8 = arith.constant 0 : index
    %18 = vector.load %arg5[%c0_7, %c0_8] : memref<24x128xf32, #tpu.memory_space<vmem>>, vector<24x128xf32>
    tpu.vector_store %arg5[%c0_7, %c0_8], %17#2 {strides = array<i32>} : memref<24x128xf32, #tpu.memory_space<vmem>>, vector<24x128xf32>,
    return
  }
  func.func @transform_0(%arg0: i32) -> i32 {
    %c0_i32 = arith.constant 0 : i32
    %c0_i32_0 = arith.constant 0 : i32
    return %c0_i32 : i32
  }
  func.func @transform_1(%arg0: i32) -> i32 {
    %c0_i32 = arith.constant 0 : i32
    %c0_i32_0 = arith.constant 0 : i32
    return %c0_i32 : i32
  }
  func.func @transform_2(%arg0: i32) -> (i32, i32) {
    %c0_i32 = arith.constant 0 : i32
    %c0_i32_0 = arith.constant 0 : i32
    %c0_i32_1 = arith.constant 0 : i32
    return %c0_i32, %c0_i32_0 : i32, i32
  }
  func.func @transform_3(%arg0: i32) -> (i32, i32) {
    %c0_i32 = arith.constant 0 : i32
    %c0_i32_0 = arith.constant 0 : i32
    return %c0_i32, %arg0 : i32, i32
  }
  func.func @transform_4(%arg0: i32) -> (i32, i32) {
    %c0_i32 = arith.constant 0 : i32
    %c0_i32_0 = arith.constant 0 : i32
    return %c0_i32, %arg0 : i32, i32
  }
}

</mosaic_0001>

<llo_original>
// kernel: encoder_forward.1
$region0: #{encoder_forward.1}
  #allocation0 [shape = 'u32[]', space=smem, size = 0x4, offset = 0x4, fixed_abs, tag = 'smem constant byte address 0x4 - core index']
  #allocation1 [shape = 'u32[144,128]{1,0:T(1,128)}', space=vmem, size = 0x12000, scoped, tag = 'internal scratch']
  #allocation2 [shape = 'f32[1]{0:T(128)S(6)}', space=smem, size = 0x200, scoped, tag = 'scoped memory for encoder_forward.1']
  %s0 = inlined_call_operand.<no memory space> [shape: f32[1], index: 0, kind: input, shape index: {}]
  %s1 = inlined_call_operand.vmem [shape: f32[100], index: 1, kind: input, shape index: {}]
  %s2 = inlined_call_operand.vmem [shape: f32[24,24], index: 2, kind: input, shape index: {}]
  %s3 = inlined_call_operand.vmem [shape: f32[24,128], index: 3, kind: input, shape index: {}]
  %s4 = inlined_call_operand.vmem [shape: f32[24,128], index: 4, kind: output, shape index: {}]
  %s5 = sld [smem:[#allocation0]]
  $region44: #{encoder_forward.1} parent=0
    _
  %s7 = ssub.s32 1, %s5
  %s8 = scalar_select 0, %s7, %s5
  %9 = sst [smem:[#allocation2]] %s0
  $region1: #{encoder_forward.1} parent=0
    #allocation3 [shape = 'u8[512]{0}', space=smem, size = 0x200, scoped, tag = 'input window, operand 1, single buffered']
    #allocation4 [shape = 's32[1]{0}', space=sflag, size = 0x4, scoped, tag = 'scoped memory for encoder_forward.1']
    %10 = vsyncpa [#allocation4], 0
    // Predicated region
    $region2: #{encoder_forward.1} parent=1 // pred_check
      _
    $region3: #{encoder_forward.1} parent=1 // pred_check_branch
      %12 = sbr.rel (0) target = $region5
    $region4: #{encoder_forward.1} parent=1 // pred_region
      _
    $region5: #{encoder_forward.1} parent=1 // pred_fallthru
      _
    // Predicated region
    $region6: #{encoder_forward.1} parent=1 // pred_check
      _
    $region7: #{encoder_forward.1} parent=1 // pred_check_branch
      %14 = sbr.rel (0) target = $region9
    $region8: #{encoder_forward.1} parent=1 // pred_region
      %s16 = ssub.s32 16, 16
      %17 = vsyncadd [#allocation4], %s16
      %s19 = sshll.u32 %s1, 4
      %s20 = int_to_ptr.vmem [resolvable:$true] %s19
      %22 = dma.vmem_to_smem %s20, 16, [#allocation3], [#allocation4]
    $region9: #{encoder_forward.1} parent=1 // pred_fallthru
      _
    // Predicated region
    $region10: #{encoder_forward.1} parent=1 // pred_check
      _
    $region11: #{encoder_forward.1} parent=1 // pred_check_branch
      %24 = sbr.rel (0) target = $region13
    $region12: #{encoder_forward.1} parent=1 // pred_region
      _
    $region13: #{encoder_forward.1} parent=1 // pred_fallthru
      _
    // Predicated region
    $region14: #{encoder_forward.1} parent=1 // pred_check
      _
    $region15: #{encoder_forward.1} parent=1 // pred_check_branch
      %26 = sbr.rel (0) target = $region17
    $region16: #{encoder_forward.1} parent=1 // pred_region
      _
    $region17: #{encoder_forward.1} parent=1 // pred_fallthru
      _
    // Predicated region
    $region18: #{encoder_forward.1} parent=1 // pred_check
      _
    $region19: #{encoder_forward.1} parent=1 // pred_check_branch
      %28 = sbr.rel (0) target = $region21
    $region20: #{encoder_forward.1} parent=1 // pred_region
      %29 = dma.done [#allocation4], 16
    $region21: #{encoder_forward.1} parent=1 // pred_fallthru
      _
    %30 = sfence
    %v31 = vld [vmem:[%s2] sm:$0xff]
    %v32 = vld [vmem:[%s2 + $0x8] sm:$0xff]
    %v33 = vld [vmem:[%s2 + $0x10] sm:$0xff]
    %v34 = vld [vmem:[%s3] sm:$0xff]
    %v35 = vld [vmem:[%s3 + $0x8] sm:$0xff]
    %v36 = vld [vmem:[%s3 + $0x10] sm:$0xff]
    %s37 = sld [smem:[#allocation2]]
    %s38 = ssub.f32 0.0, %s37
    %v39 = vstv %s38
    %v40 = vmax.f32 %v34, %v39
    %v41 = vmax.f32 %v35, %v39
    %v42 = vmax.f32 %v36, %v39
    %v43 = vstv %s37
    %v44 = vmin.f32 %v40, %v43
    %v45 = vmin.f32 %v41, %v43
    %v46 = vmin.f32 %v42, %v43
    %v47 = vsub.f32 %v34, %v44
    %v48 = vsub.f32 %v35, %v45
    %v49 = vsub.f32 %v36, %v46
    %v50 = vmul.f32 %v47, %v47
    %v51 = vmul.f32 %v48, %v48
    %v52 = vmul.f32 %v49, %v49
    %v53 = vadd.f32 %v50, %v51
    %v54 = vadd.f32 %v53, %v52
    %55 = vadd.xlane.f32.xlu0 %v54
    %v56 = vpop.xlane.xlu0 %55
    %v57 = vrot.slane %v56, 4
    %v58 = vadd.f32 %v56, %v57
    %v59 = vrot.slane %v58, 2
    %v60 = vadd.f32 %v58, %v59
    %v61 = vrot.slane %v60, 1
    %v62 = vadd.f32 %v60, %v61
    %s63 = vtos %v62
    %p64 = scmp.lt.f32.partialorder %s63, 5.76e-06
    %s65 = scalar_select %p64, 1, 0
    // While loop
    $region22: #{encoder_forward.1} parent=1 // loop_pre_header
      _
    $region23: #{encoder_forward.1} parent=1 // loop_header
      %s67 = sphi 0, %s510
      %s68 = sphi %s65, %s512
      %v69 = vphi %v47, %v482
      %v70 = vphi %v48, %v483
      %v71 = vphi %v49, %v484
      %v72 = vphi %v47, %v493
      %v73 = vphi %v48, %v494
      %v74 = vphi %v49, %v495
      %p75 = scmp.eq.s32.totalorder %s68, 0
      %p76 = scmp.lt.s32.totalorder %s67, 24
      %p77 = pnand %p75, %p76
      %p78 = pneg %p77
    $region24: #{encoder_forward.1} parent=1 // loop_header_branch
      %80 = sbr.rel (%p77) target = $region28
    $region25: #{encoder_forward.1} parent=1 // loop_body
      %s81 = smul.u32 %s67, 4
      %s82 = sadd.s32 %s81, 1
      %vm83 = vcmask 195584
      %v85 = vsel %vm83, %v31, 0
      %v88 = vsel %vm83, %v32, 0
      %v91 = vsel %vm83, %v33, 0
      %93 = vmatprep.subr.mxu0 0.0
      %94 = vmatpush1.msra.mxu0 %v72
      %95 = vmatprep.subr.mxu0 0.0
      %96 = vmatpush1.msra.mxu0 %v73
      %97 = vmatprep.subr.mxu0 0.0
      %98 = vmatpush1.msra.mxu0 %v74
      %99 = vmatprep.subr.mxu0 0.0
      %100 = vmatpush1.msra.mxu0 0.0
      %101 = vmatprep.subr.mxu0 0.0
      %102 = vmatpush1.msra.mxu0 0.0
      %103 = vmatprep.subr.mxu0 0.0
      %104 = vmatpush1.msra.mxu0 0.0
      %105 = vmatprep.subr.mxu0 0.0
      %106 = vmatpush1.msra.mxu0 0.0
      %107 = vmatprep.subr.mxu0 0.0
      %108 = vmatpush1.msra.mxu0 0.0
      %109 = vmatprep.subr.mxu0 0.0
      %110 = vmatpush1.msra.mxu0 0.0
      %111 = vmatprep.subr.mxu0 0.0
      %112 = vmatpush1.msra.mxu0 0.0
      %113 = vmatprep.subr.mxu0 0.0
      %114 = vmatpush1.msra.mxu0 0.0
      %115 = vmatprep.subr.mxu0 0.0
      %116 = vmatpush1.msra.mxu0 0.0
      %117 = vmatprep.subr.mxu0 0.0
      %118 = vmatpush1.msra.mxu0 0.0
      %119 = vmatprep.subr.mxu0 0.0
      %120 = vmatpush1.msra.mxu0 0.0
      %121 = vmatprep.subr.mxu0 0.0
      %122 = vmatpush1.msra.mxu0 0.0
      %123 = vmatprep.subr.mxu0 0.0
      %124 = vmatpush1.msra.mxu0 0.0
      %125 = vmatprep.subr.mxu0 0.0
      %126 = vmatpush1.msra.mxu0 0.0
      %127 = vmatprep.subr.mxu0 0.0
      %128 = vmatpush1.msra.mxu0 0.0
      %129 = vmatprep.subr.mxu0 0.0
      %130 = vmatpush1.msra.mxu0 0.0
      %131 = vmatprep.subr.mxu0 0.0
      %132 = vmatpush1.msra.mxu0 0.0
      %133 = vmatprep.subr.mxu0 0.0
      %134 = vmatpush1.msra.mxu0 0.0
      %135 = vmatprep.subr.mxu0 0.0
      %136 = vmatpush1.msra.mxu0 0.0
      %137 = vmatprep.subr.mxu0 0.0
      %138 = vmatpush1.msra.mxu0 0.0
      %139 = vmatprep.subr.mxu0 0.0
      %140 = vmatpush1.msra.mxu0 0.0
      %141 = vmatprep.subr.mxu0 0.0
      %142 = vmatpush1.msra.mxu0 0.0
      %143 = vmatprep.subr.mxu0 0.0
      %144 = vmatpush1.msra.mxu0 0.0
      %145 = vmatprep.subr.mxu0 0.0
      %146 = vmatpush1.msra.mxu0 0.0
      %147 = vmatprep.subr.mxu0 0.0
      %148 = vmatpush1.msra.mxu0 0.0
      %149 = vmatprep.subr.mxu0 0.0
      %150 = vmatpush1.msra.mxu0 0.0
      %151 = vmatprep.subr.mxu0 0.0
      %152 = vmatpush1.msra.mxu0 0.0
      %153 = vmatprep.subr.mxu0 0.0
      %154 = vmatpush1.msra.mxu0 0.0
      %155 = vmatprep.subr.mxu0 0.0
      %156 = vmatpush1.msra.mxu0 0.0
      %157 = vmatprep.mubr.f32.mxu0 0.0
      %158 = vmatmul.mubr.f32.gmra.mrb[0].mxu0 %v85
      %v159 = vpop.f32.mrb[0].mxu0
      %v160 = vadd.f32 %v34, %v159
      %v161 = vpop.f32.mrb[0].mxu0
      %162 = vmatprep.mubr.f32.mxu0 0.0
      %163 = vmatmul.mubr.f32.gmra.mrb[0].mxu0 %v88
      %v164 = vpop.f32.mrb[0].mxu0
      %v165 = vadd.f32 %v35, %v164
      %v166 = vpop.f32.mrb[0].mxu0
      %167 = vmatprep.mubr.f32.mxu0 0.0
      %168 = vmatmul.mubr.f32.gmra.mrb[0].mxu0 %v91
      %v169 = vpop.f32.mrb[0].mxu0
      %v170 = vadd.f32 %v36, %v169
      %v171 = vpop.f32.mrb[0].mxu0
      %172 = vdwg.mxu0
      %v173 = vmax.f32 %v160, %v39
      %v174 = vmax.f32 %v165, %v39
      %v175 = vmax.f32 %v170, %v39
      %v176 = vmin.f32 %v173, %v43
      %v177 = vmin.f32 %v174, %v43
      %v178 = vmin.f32 %v175, %v43
      %v179 = vsub.f32 %v160, %v176
      %v180 = vsub.f32 %v165, %v177
      %v181 = vsub.f32 %v170, %v178
      %v182 = vsub.f32 %v179, %v69
      %v183 = vsub.f32 %v180, %v70
      %v184 = vsub.f32 %v181, %v71
      %s185 = sld [smem:[#allocation3 + %s82]]
      %v186 = vstv %s185
      %v187 = vmul.f32 %v186, %v182
      %v188 = vmul.f32 %v186, %v183
      %v189 = vmul.f32 %v186, %v184
      %v190 = vadd.f32 %v179, %v187
      %v191 = vadd.f32 %v180, %v188
      %v192 = vadd.f32 %v181, %v189
      %s193 = sadd.s32 %s81, 2
      %194 = vmatprep.subr.mxu0 0.0
      %195 = vmatpush1.msra.mxu0 %v190
      %196 = vmatprep.subr.mxu0 0.0
      %197 = vmatpush1.msra.mxu0 %v191
      %198 = vmatprep.subr.mxu0 0.0
      %199 = vmatpush1.msra.mxu0 %v192
      %200 = vmatprep.subr.mxu0 0.0
      %201 = vmatpush1.msra.mxu0 0.0
      %202 = vmatprep.subr.mxu0 0.0
      %203 = vmatpush1.msra.mxu0 0.0
      %204 = vmatprep.subr.mxu0 0.0
      %205 = vmatpush1.msra.mxu0 0.0
      %206 = vmatprep.subr.mxu0 0.0
      %207 = vmatpush1.msra.mxu0 0.0
      %208 = vmatprep.subr.mxu0 0.0
      %209 = vmatpush1.msra.mxu0 0.0
      %210 = vmatprep.subr.mxu0 0.0
      %211 = vmatpush1.msra.mxu0 0.0
      %212 = vmatprep.subr.mxu0 0.0
      %213 = vmatpush1.msra.mxu0 0.0
      %214 = vmatprep.subr.mxu0 0.0
      %215 = vmatpush1.msra.mxu0 0.0
      %216 = vmatprep.subr.mxu0 0.0
      %217 = vmatpush1.msra.mxu0 0.0
      %218 = vmatprep.subr.mxu0 0.0
      %219 = vmatpush1.msra.mxu0 0.0
      %220 = vmatprep.subr.mxu0 0.0
      %221 = vmatpush1.msra.mxu0 0.0
      %222 = vmatprep.subr.mxu0 0.0
      %223 = vmatpush1.msra.mxu0 0.0
      %224 = vmatprep.subr.mxu0 0.0
      %225 = vmatpush1.msra.mxu0 0.0
      %226 = vmatprep.subr.mxu0 0.0
      %227 = vmatpush1.msra.mxu0 0.0
      %228 = vmatprep.subr.mxu0 0.0
      %229 = vmatpush1.msra.mxu0 0.0
      %230 = vmatprep.subr.mxu0 0.0
      %231 = vmatpush1.msra.mxu0 0.0
      %232 = vmatprep.subr.mxu0 0.0
      %233 = vmatpush1.msra.mxu0 0.0
      %234 = vmatprep.subr.mxu0 0.0
      %235 = vmatpush1.msra.mxu0 0.0
      %236 = vmatprep.subr.mxu0 0.0
      %237 = vmatpush1.msra.mxu0 0.0
      %238 = vmatprep.subr.mxu0 0.0
      %239 = vmatpush1.msra.mxu0 0.0
      %240 = vmatprep.subr.mxu0 0.0
      %241 = vmatpush1.msra.mxu0 0.0
      %242 = vmatprep.subr.mxu0 0.0
      %243 = vmatpush1.msra.mxu0 0.0
      %244 = vmatprep.subr.mxu0 0.0
      %245 = vmatpush1.msra.mxu0 0.0
      %246 = vmatprep.subr.mxu0 0.0
      %247 = vmatpush1.msra.mxu0 0.0
      %248 = vmatprep.subr.mxu0 0.0
      %249 = vmatpush1.msra.mxu0 0.0
      %250 = vmatprep.subr.mxu0 0.0
      %251 = vmatpush1.msra.mxu0 0.0
      %252 = vmatprep.subr.mxu0 0.0
      %253 = vmatpush1.msra.mxu0 0.0
      %254 = vmatprep.subr.mxu0 0.0
      %255 = vmatpush1.msra.mxu0 0.0
      %256 = vmatprep.subr.mxu0 0.0
      %257 = vmatpush1.msra.mxu0 0.0
      %258 = vmatprep.mubr.f32.mxu0 0.0
      %259 = vmatmul.mubr.f32.gmra.mrb[0].mxu0 %v85
      %v260 = vpop.f32.mrb[0].mxu0
      %v261 = vadd.f32 %v34, %v260
      %v262 = vpop.f32.mrb[0].mxu0
      %263 = vmatprep.mubr.f32.mxu0 0.0
      %264 = vmatmul.mubr.f32.gmra.mrb[0].mxu0 %v88
      %v265 = vpop.f32.mrb[0].mxu0
      %v266 = vadd.f32 %v35, %v265
      %v267 = vpop.f32.mrb[0].mxu0
      %268 = vmatprep.mubr.f32.mxu0 0.0
      %269 = vmatmul.mubr.f32.gmra.mrb[0].mxu0 %v91
      %v270 = vpop.f32.mrb[0].mxu0
      %v271 = vadd.f32 %v36, %v270
      %v272 = vpop.f32.mrb[0].mxu0
      %273 = vdwg.mxu0
      %v274 = vmax.f32 %v261, %v39
      %v275 = vmax.f32 %v266, %v39
      %v276 = vmax.f32 %v271, %v39
      %v277 = vmin.f32 %v274, %v43
      %v278 = vmin.f32 %v275, %v43
      %v279 = vmin.f32 %v276, %v43
      %v280 = vsub.f32 %v261, %v277
      %v281 = vsub.f32 %v266, %v278
      %v282 = vsub.f32 %v271, %v279
      %v283 = vsub.f32 %v280, %v179
      %v284 = vsub.f32 %v281, %v180
      %v285 = vsub.f32 %v282, %v181
      %s286 = sld [smem:[#allocation3 + %s193]]
      %v287 = vstv %s286
      %v288 = vmul.f32 %v287, %v283
      %v289 = vmul.f32 %v287, %v284
      %v290 = vmul.f32 %v287, %v285
      %v291 = vadd.f32 %v280, %v288
      %v292 = vadd.f32 %v281, %v289
      %v293 = vadd.f32 %v282, %v290
      %s294 = sadd.s32 %s81, 3
      %295 = vmatprep.subr.mxu0 0.0
      %296 = vmatpush1.msra.mxu0 %v291
      %297 = vmatprep.subr.mxu0 0.0
      %298 = vmatpush1.msra.mxu0 %v292
      %299 = vmatprep.subr.mxu0 0.0
      %300 = vmatpush1.msra.mxu0 %v293
      %301 = vmatprep.subr.mxu0 0.0
      %302 = vmatpush1.msra.mxu0 0.0
      %303 = vmatprep.subr.mxu0 0.0
      %304 = vmatpush1.msra.mxu0 0.0
      %305 = vmatprep.subr.mxu0 0.0
      %306 = vmatpush1.msra.mxu0 0.0
      %307 = vmatprep.subr.mxu0 0.0
      %308 = vmatpush1.msra.mxu0 0.0
      %309 = vmatprep.subr.mxu0 0.0
      %310 = vmatpush1.msra.mxu0 0.0
      %311 = vmatprep.subr.mxu0 0.0
      %312 = vmatpush1.msra.mxu0 0.0
      %313 = vmatprep.subr.mxu0 0.0
      %314 = vmatpush1.msra.mxu0 0.0
      %315 = vmatprep.subr.mxu0 0.0
      %316 = vmatpush1.msra.mxu0 0.0
      %317 = vmatprep.subr.mxu0 0.0
      %318 = vmatpush1.msra.mxu0 0.0
      %319 = vmatprep.subr.mxu0 0.0
      %320 = vmatpush1.msra.mxu0 0.0
      %321 = vmatprep.subr.mxu0 0.0
      %322 = vmatpush1.msra.mxu0 0.0
      %323 = vmatprep.subr.mxu0 0.0
      %324 = vmatpush1.msra.mxu0 0.0
      %325 = vmatprep.subr.mxu0 0.0
      %326 = vmatpush1.msra.mxu0 0.0
      %327 = vmatprep.subr.mxu0 0.0
      %328 = vmatpush1.msra.mxu0 0.0
      %329 = vmatprep.subr.mxu0 0.0
      %330 = vmatpush1.msra.mxu0 0.0
      %331 = vmatprep.subr.mxu0 0.0
      %332 = vmatpush1.msra.mxu0 0.0
      %333 = vmatprep.subr.mxu0 0.0
      %334 = vmatpush1.msra.mxu0 0.0
      %335 = vmatprep.subr.mxu0 0.0
      %336 = vmatpush1.msra.mxu0 0.0
      %337 = vmatprep.subr.mxu0 0.0
      %338 = vmatpush1.msra.mxu0 0.0
      %339 = vmatprep.subr.mxu0 0.0
      %340 = vmatpush1.msra.mxu0 0.0
      %341 = vmatprep.subr.mxu0 0.0
      %342 = vmatpush1.msra.mxu0 0.0
      %343 = vmatprep.subr.mxu0 0.0
      %344 = vmatpush1.msra.mxu0 0.0
      %345 = vmatprep.subr.mxu0 0.0
      %346 = vmatpush1.msra.mxu0 0.0
      %347 = vmatprep.subr.mxu0 0.0
      %348 = vmatpush1.msra.mxu0 0.0
      %349 = vmatprep.subr.mxu0 0.0
      %350 = vmatpush1.msra.mxu0 0.0
      %351 = vmatprep.subr.mxu0 0.0
      %352 = vmatpush1.msra.mxu0 0.0
      %353 = vmatprep.subr.mxu0 0.0
      %354 = vmatpush1.msra.mxu0 0.0
      %355 = vmatprep.subr.mxu0 0.0
      %356 = vmatpush1.msra.mxu0 0.0
      %357 = vmatprep.subr.mxu0 0.0
      %358 = vmatpush1.msra.mxu0 0.0
      %359 = vmatprep.mubr.f32.mxu0 0.0
      %360 = vmatmul.mubr.f32.gmra.mrb[0].mxu0 %v85
      %v361 = vpop.f32.mrb[0].mxu0
      %v362 = vadd.f32 %v34, %v361
      %v363 = vpop.f32.mrb[0].mxu0
      %364 = vmatprep.mubr.f32.mxu0 0.0
      %365 = vmatmul.mubr.f32.gmra.mrb[0].mxu0 %v88
      %v366 = vpop.f32.mrb[0].mxu0
      %v367 = vadd.f32 %v35, %v366
      %v368 = vpop.f32.mrb[0].mxu0
      %369 = vmatprep.mubr.f32.mxu0 0.0
      %370 = vmatmul.mubr.f32.gmra.mrb[0].mxu0 %v91
      %v371 = vpop.f32.mrb[0].mxu0
      %v372 = vadd.f32 %v36, %v371
      %v373 = vpop.f32.mrb[0].mxu0
      %374 = vdwg.mxu0
      %v375 = vmax.f32 %v362, %v39
      %v376 = vmax.f32 %v367, %v39
      %v377 = vmax.f32 %v372, %v39
      %v378 = vmin.f32 %v375, %v43
      %v379 = vmin.f32 %v376, %v43
      %v380 = vmin.f32 %v377, %v43
      %v381 = vsub.f32 %v362, %v378
      %v382 = vsub.f32 %v367, %v379
      %v383 = vsub.f32 %v372, %v380
      %v384 = vsub.f32 %v381, %v280
      %v385 = vsub.f32 %v382, %v281
      %v386 = vsub.f32 %v383, %v282
      %s387 = sld [smem:[#allocation3 + %s294]]
      %v388 = vstv %s387
      %v389 = vmul.f32 %v388, %v384
      %v390 = vmul.f32 %v388, %v385
      %v391 = vmul.f32 %v388, %v386
      %v392 = vadd.f32 %v381, %v389
      %v393 = vadd.f32 %v382, %v390
      %v394 = vadd.f32 %v383, %v391
      %s395 = sadd.s32 %s81, 4
      %396 = vmatprep.subr.mxu0 0.0
      %397 = vmatpush1.msra.mxu0 %v392
      %398 = vmatprep.subr.mxu0 0.0
      %399 = vmatpush1.msra.mxu0 %v393
      %400 = vmatprep.subr.mxu0 0.0
      %401 = vmatpush1.msra.mxu0 %v394
      %402 = vmatprep.subr.mxu0 0.0
      %403 = vmatpush1.msra.mxu0 0.0
      %404 = vmatprep.subr.mxu0 0.0
      %405 = vmatpush1.msra.mxu0 0.0
      %406 = vmatprep.subr.mxu0 0.0
      %407 = vmatpush1.msra.mxu0 0.0
      %408 = vmatprep.subr.mxu0 0.0
      %409 = vmatpush1.msra.mxu0 0.0
      %410 = vmatprep.subr.mxu0 0.0
      %411 = vmatpush1.msra.mxu0 0.0
      %412 = vmatprep.subr.mxu0 0.0
      %413 = vmatpush1.msra.mxu0 0.0
      %414 = vmatprep.subr.mxu0 0.0
      %415 = vmatpush1.msra.mxu0 0.0
      %416 = vmatprep.subr.mxu0 0.0
      %417 = vmatpush1.msra.mxu0 0.0
      %418 = vmatprep.subr.mxu0 0.0
      %419 = vmatpush1.msra.mxu0 0.0
      %420 = vmatprep.subr.mxu0 0.0
      %421 = vmatpush1.msra.mxu0 0.0
      %422 = vmatprep.subr.mxu0 0.0
      %423 = vmatpush1.msra.mxu0 0.0
      %424 = vmatprep.subr.mxu0 0.0
      %425 = vmatpush1.msra.mxu0 0.0
      %426 = vmatprep.subr.mxu0 0.0
      %427 = vmatpush1.msra.mxu0 0.0
      %428 = vmatprep.subr.mxu0 0.0
      %429 = vmatpush1.msra.mxu0 0.0
      %430 = vmatprep.subr.mxu0 0.0
      %431 = vmatpush1.msra.mxu0 0.0
      %432 = vmatprep.subr.mxu0 0.0
      %433 = vmatpush1.msra.mxu0 0.0
      %434 = vmatprep.subr.mxu0 0.0
      %435 = vmatpush1.msra.mxu0 0.0
      %436 = vmatprep.subr.mxu0 0.0
      %437 = vmatpush1.msra.mxu0 0.0
      %438 = vmatprep.subr.mxu0 0.0
      %439 = vmatpush1.msra.mxu0 0.0
      %440 = vmatprep.subr.mxu0 0.0
      %441 = vmatpush1.msra.mxu0 0.0
      %442 = vmatprep.subr.mxu0 0.0
      %443 = vmatpush1.msra.mxu0 0.0
      %444 = vmatprep.subr.mxu0 0.0
      %445 = vmatpush1.msra.mxu0 0.0
      %446 = vmatprep.subr.mxu0 0.0
      %447 = vmatpush1.msra.mxu0 0.0
      %448 = vmatprep.subr.mxu0 0.0
      %449 = vmatpush1.msra.mxu0 0.0
      %450 = vmatprep.subr.mxu0 0.0
      %451 = vmatpush1.msra.mxu0 0.0
      %452 = vmatprep.subr.mxu0 0.0
      %453 = vmatpush1.msra.mxu0 0.0
      %454 = vmatprep.subr.mxu0 0.0
      %455 = vmatpush1.msra.mxu0 0.0
      %456 = vmatprep.subr.mxu0 0.0
      %457 = vmatpush1.msra.mxu0 0.0
      %458 = vmatprep.subr.mxu0 0.0
      %459 = vmatpush1.msra.mxu0 0.0
      %460 = vmatprep.mubr.f32.mxu0 0.0
      %461 = vmatmul.mubr.f32.gmra.mrb[0].mxu0 %v85
      %v462 = vpop.f32.mrb[0].mxu0
      %v463 = vadd.f32 %v34, %v462
      %v464 = vpop.f32.mrb[0].mxu0
      %465 = vmatprep.mubr.f32.mxu0 0.0
      %466 = vmatmul.mubr.f32.gmra.mrb[0].mxu0 %v88
      %v467 = vpop.f32.mrb[0].mxu0
      %v468 = vadd.f32 %v35, %v467
      %v469 = vpop.f32.mrb[0].mxu0
      %470 = vmatprep.mubr.f32.mxu0 0.0
      %471 = vmatmul.mubr.f32.gmra.mrb[0].mxu0 %v91
      %v472 = vpop.f32.mrb[0].mxu0
      %v473 = vadd.f32 %v36, %v472
      %v474 = vpop.f32.mrb[0].mxu0
      %475 = vdwg.mxu0
      %v476 = vmax.f32 %v463, %v39
      %v477 = vmax.f32 %v468, %v39
      %v478 = vmax.f32 %v473, %v39
      %v479 = vmin.f32 %v476, %v43
      %v480 = vmin.f32 %v477, %v43
      %v481 = vmin.f32 %v478, %v43
      %v482 = vsub.f32 %v463, %v479
      %v483 = vsub.f32 %v468, %v480
      %v484 = vsub.f32 %v473, %v481
      %v485 = vsub.f32 %v482, %v381
      %v486 = vsub.f32 %v483, %v382
      %v487 = vsub.f32 %v484, %v383
      %s488 = sld [smem:[#allocation3 + %s395]]
      %v489 = vstv %s488
      %v490 = vmul.f32 %v489, %v485
      %v491 = vmul.f32 %v489, %v486
      %v492 = vmul.f32 %v489, %v487
      %v493 = vadd.f32 %v482, %v490
      %v494 = vadd.f32 %v483, %v491
      %v495 = vadd.f32 %v484, %v492
      %v496 = vmul.f32 %v485, %v485
      %v497 = vmul.f32 %v486, %v486
      %v498 = vmul.f32 %v487, %v487
      %v499 = vadd.f32 %v496, %v497
      %v500 = vadd.f32 %v499, %v498
      %501 = vadd.xlane.f32.xlu0 %v500
      %v502 = vpop.xlane.xlu0 %501
      %v503 = vrot.slane %v502, 4
      %v504 = vadd.f32 %v502, %v503
      %v505 = vrot.slane %v504, 2
      %v506 = vadd.f32 %v504, %v505
      %v507 = vrot.slane %v506, 1
      %v508 = vadd.f32 %v506, %v507
      %s509 = vtos %v508
      %s510 = sadd.s32 %s67, 1
      %p511 = scmp.lt.f32.partialorder %s509, 2.89e-06
      %s512 = scalar_select %p511, 1, 0
    $region26: #{encoder_forward.1} parent=1 // loop_footer
      _
    $region27: #{encoder_forward.1} parent=1 // loop_footer_branch
      %66 = sbr.rel target = $region23
    $region28: #{encoder_forward.1} parent=1 // loop_exit
      _
    // While loop
    $region29: #{encoder_forward.1} parent=1 // loop_pre_header
      _
    $region30: #{encoder_forward.1} parent=1 // loop_header
      %s514 = sphi 0, %s653
      %s515 = sphi %s68, %s655
      %v516 = vphi %v69, %v625
      %v517 = vphi %v70, %v626
      %v518 = vphi %v71, %v627
      %v519 = vphi %v72, %v636
      %v520 = vphi %v73, %v637
      %v521 = vphi %v74, %v638
      %p522 = scmp.eq.s32.totalorder %s515, 0
      %p523 = scmp.lt.s32.totalorder %s514, 3
      %p524 = pnand %p522, %p523
      %p525 = pneg %p524
    $region31: #{encoder_forward.1} parent=1 // loop_header_branch
      %527 = sbr.rel (%p524) target = $region35
    $region32: #{encoder_forward.1} parent=1 // loop_body
      %s528 = sadd.s32 %s514, 97
      %vm529 = vcmask 195584
      %v531 = vsel %vm529, %v31, 0
      %v534 = vsel %vm529, %v32, 0
      %v537 = vsel %vm529, %v33, 0
      %539 = vmatprep.subr.mxu0 0.0
      %540 = vmatpush1.msra.mxu0 %v519
      %541 = vmatprep.subr.mxu0 0.0
      %542 = vmatpush1.msra.mxu0 %v520
      %543 = vmatprep.subr.mxu0 0.0
      %544 = vmatpush1.msra.mxu0 %v521
      %545 = vmatprep.subr.mxu0 0.0
      %546 = vmatpush1.msra.mxu0 0.0
      %547 = vmatprep.subr.mxu0 0.0
      %548 = vmatpush1.msra.mxu0 0.0
      %549 = vmatprep.subr.mxu0 0.0
      %550 = vmatpush1.msra.mxu0 0.0
      %551 = vmatprep.subr.mxu0 0.0
      %552 = vmatpush1.msra.mxu0 0.0
      %553 = vmatprep.subr.mxu0 0.0
      %554 = vmatpush1.msra.mxu0 0.0
      %555 = vmatprep.subr.mxu0 0.0
      %556 = vmatpush1.msra.mxu0 0.0
      %557 = vmatprep.subr.mxu0 0.0
      %558 = vmatpush1.msra.mxu0 0.0
      %559 = vmatprep.subr.mxu0 0.0
      %560 = vmatpush1.msra.mxu0 0.0
      %561 = vmatprep.subr.mxu0 0.0
      %562 = vmatpush1.msra.mxu0 0.0
      %563 = vmatprep.subr.mxu0 0.0
      %564 = vmatpush1.msra.mxu0 0.0
      %565 = vmatprep.subr.mxu0 0.0
      %566 = vmatpush1.msra.mxu0 0.0
      %567 = vmatprep.subr.mxu0 0.0
      %568 = vmatpush1.msra.mxu0 0.0
      %569 = vmatprep.subr.mxu0 0.0
      %570 = vmatpush1.msra.mxu0 0.0
      %571 = vmatprep.subr.mxu0 0.0
      %572 = vmatpush1.msra.mxu0 0.0
      %573 = vmatprep.subr.mxu0 0.0
      %574 = vmatpush1.msra.mxu0 0.0
      %575 = vmatprep.subr.mxu0 0.0
      %576 = vmatpush1.msra.mxu0 0.0
      %577 = vmatprep.subr.mxu0 0.0
      %578 = vmatpush1.msra.mxu0 0.0
      %579 = vmatprep.subr.mxu0 0.0
      %580 = vmatpush1.msra.mxu0 0.0
      %581 = vmatprep.subr.mxu0 0.0
      %582 = vmatpush1.msra.mxu0 0.0
      %583 = vmatprep.subr.mxu0 0.0
      %584 = vmatpush1.msra.mxu0 0.0
      %585 = vmatprep.subr.mxu0 0.0
      %586 = vmatpush1.msra.mxu0 0.0
      %587 = vmatprep.subr.mxu0 0.0
      %588 = vmatpush1.msra.mxu0 0.0
      %589 = vmatprep.subr.mxu0 0.0
      %590 = vmatpush1.msra.mxu0 0.0
      %591 = vmatprep.subr.mxu0 0.0
      %592 = vmatpush1.msra.mxu0 0.0
      %593 = vmatprep.subr.mxu0 0.0
      %594 = vmatpush1.msra.mxu0 0.0
      %595 = vmatprep.subr.mxu0 0.0
      %596 = vmatpush1.msra.mxu0 0.0
      %597 = vmatprep.subr.mxu0 0.0
      %598 = vmatpush1.msra.mxu0 0.0
      %599 = vmatprep.subr.mxu0 0.0
      %600 = vmatpush1.msra.mxu0 0.0
      %601 = vmatprep.subr.mxu0 0.0
      %602 = vmatpush1.msra.mxu0 0.0
      %603 = vmatprep.mubr.f32.mxu0 0.0
      %604 = vmatmul.mubr.f32.gmra.mrb[0].mxu0 %v531
      %v605 = vpop.f32.mrb[0].mxu0
      %v606 = vadd.f32 %v34, %v605
      %v607 = vpop.f32.mrb[0].mxu0
      %608 = vmatprep.mubr.f32.mxu0 0.0
      %609 = vmatmul.mubr.f32.gmra.mrb[0].mxu0 %v534
      %v610 = vpop.f32.mrb[0].mxu0
      %v611 = vadd.f32 %v35, %v610
      %v612 = vpop.f32.mrb[0].mxu0
      %613 = vmatprep.mubr.f32.mxu0 0.0
      %614 = vmatmul.mubr.f32.gmra.mrb[0].mxu0 %v537
      %v615 = vpop.f32.mrb[0].mxu0
      %v616 = vadd.f32 %v36, %v615
      %v617 = vpop.f32.mrb[0].mxu0
      %618 = vdwg.mxu0
      %v619 = vmax.f32 %v606, %v39
      %v620 = vmax.f32 %v611, %v39
      %v621 = vmax.f32 %v616, %v39
      %v622 = vmin.f32 %v619, %v43
      %v623 = vmin.f32 %v620, %v43
      %v624 = vmin.f32 %v621, %v43
      %v625 = vsub.f32 %v606, %v622
      %v626 = vsub.f32 %v611, %v623
      %v627 = vsub.f32 %v616, %v624
      %v628 = vsub.f32 %v625, %v516
      %v629 = vsub.f32 %v626, %v517
      %v630 = vsub.f32 %v627, %v518
      %s631 = sld [smem:[#allocation3 + %s528]]
      %v632 = vstv %s631
      %v633 = vmul.f32 %v632, %v628
      %v634 = vmul.f32 %v632, %v629
      %v635 = vmul.f32 %v632, %v630
      %v636 = vadd.f32 %v625, %v633
      %v637 = vadd.f32 %v626, %v634
      %v638 = vadd.f32 %v627, %v635
      %v639 = vmul.f32 %v628, %v628
      %v640 = vmul.f32 %v629, %v629
      %v641 = vmul.f32 %v630, %v630
      %v642 = vadd.f32 %v639, %v640
      %v643 = vadd.f32 %v642, %v641
      %644 = vadd.xlane.f32.xlu0 %v643
      %v645 = vpop.xlane.xlu0 %644
      %v646 = vrot.slane %v645, 4
      %v647 = vadd.f32 %v645, %v646
      %v648 = vrot.slane %v647, 2
      %v649 = vadd.f32 %v647, %v648
      %v650 = vrot.slane %v649, 1
      %v651 = vadd.f32 %v649, %v650
      %s652 = vtos %v651
      %s653 = sadd.s32 %s514, 1
      %p654 = scmp.lt.f32.partialorder %s652, 2.89e-06
      %s655 = scalar_select %p654, 1, 0
    $region33: #{encoder_forward.1} parent=1 // loop_footer
      _
    $region34: #{encoder_forward.1} parent=1 // loop_footer_branch
      %513 = sbr.rel target = $region30
    $region35: #{encoder_forward.1} parent=1 // loop_exit
      _
    %656 = vst [vmem:[%s4] sm:$0xff] %v516
    %657 = vst [vmem:[%s4 + $0x8] sm:$0xff] %v517
    %658 = vst [vmem:[%s4 + $0x10] sm:$0xff] %v518
    // Predicated region
    $region36: #{encoder_forward.1} parent=1 // pred_check
      _
    $region37: #{encoder_forward.1} parent=1 // pred_check_branch
      %660 = sbr.rel (0) target = $region39
    $region38: #{encoder_forward.1} parent=1 // pred_region
      _
    $region39: #{encoder_forward.1} parent=1 // pred_fallthru
      _
    // Predicated region
    $region40: #{encoder_forward.1} parent=1 // pred_check
      _
    $region41: #{encoder_forward.1} parent=1 // pred_check_branch
      %662 = sbr.rel (0) target = $region43
    $region42: #{encoder_forward.1} parent=1 // pred_region
      _
    $region43: #{encoder_forward.1} parent=1 // pred_fallthru
      _
    %663 = vsyncpa [#allocation4], 1

</llo_original>
